<compile_context>
chip_gen: v7x
topology: tpu7x:2x2x1
jax: 0.10.0
libtpu: 0.0.40
codegen_flags: <defaults>
</compile_context>

<pallas_src>
import functools

import jax
import jax.numpy as jnp
from jax.experimental import pallas as pl
from jax.experimental.pallas import tpu as pltpu
from jax.scipy.special import digamma as _jsp_digamma
from jax.scipy.special import gammaln as _jsp_gammaln


_HALF_LOG_2PI = 0.9189385332046727
_LANES = 128
_ALPHA_FLOOR = 1e-6


def _softplus(x):
    # numerically stable log(1 + exp(x))
    return jnp.maximum(x, 0.0) + jnp.log1p(jnp.exp(-jnp.abs(x)))


def _lgamma_digamma_pos(x):
    """Fused lgamma(x) and digamma(x) for x > 0, sharing one 6-step recurrence.

    Shift x -> x + 6 (accumulating a running product for lgamma and a running
    reciprocal sum for digamma), then apply Stirling / asymptotic series.
    Only a single jnp.log(prod) replaces the six per-step logs.
    """
    z = x
    prod = x            # x * (x+1) * ... * (x+5)
    dshift = 1.0 / x    # 1/x + 1/(x+1) + ... + 1/(x+5)
    for _ in range(5):
        z = z + 1.0
        prod = prod * z
        dshift = dshift + 1.0 / z
    z = z + 1.0          # z = x + 6
    zi = 1.0 / z
    zi2 = zi * zi
    logz = jnp.log(z)
    lg = ((z - 0.5) * logz - z + _HALF_LOG_2PI
          + zi * (1.0 / 12.0 + zi2 * (-1.0 / 360.0
                  + zi2 * (1.0 / 1260.0 - zi2 * (1.0 / 1680.0))))
          - jnp.log(prod))
    dg = (logz - 0.5 * zi
          - zi2 * (1.0 / 12.0 - zi2 * (1.0 / 120.0 - zi2 * (1.0 / 252.0)))
          - dshift)
    return lg, dg


def _mlp_kl_kernel(n_layers, a_dim, *refs):
    # refs: noise, (w0, b0), ..., (w_{L-1}, b_{L-1}), prior_const(SMEM), pi, out
    noise_ref = refs[0]
    prior_ref = refs[1 + 2 * n_layers]          # (1, 1) SMEM scalar
    pi_ref = refs[2 + 2 * n_layers]             # (1, 128) lane-padded prior
    out_ref = refs[3 + 2 * n_layers]            # (1, 128) packed [alpha | kl | 0]

    # ---- MLP: [Linear+ReLU] * (L-1), Linear+Softplus (last layer padded
    # to 128 output lanes in the wrapper -> alpha is one full vreg) ---------
    x = noise_ref[...]                          # (1, a_dim)
    for l in range(n_layers):
        w = refs[1 + 2 * l][...]                # (in, out)
        b = refs[2 + 2 * l][...]                # (1, out)
        x = jnp.dot(x, w, preferred_element_type=jnp.float32) + b
        if l < n_layers - 1:
            x = jnp.maximum(x, 0.0)             # ReLU
        else:
            # Softplus -> Dirichlet concentration, floored so lgamma/digamma
            # and the downstream gamma sampler stay finite.
            x = jnp.maximum(_softplus(x), _ALPHA_FLOOR)

    alpha = x                                   # (1, 128), valid in [0, a_dim)
    beta = pi_ref[...]                          # (1, 128), zero-padded
    lane = jax.lax.broadcasted_iota(jnp.int32, alpha.shape, 1)
    valid = lane < a_dim

    # ---- KL( Dirichlet(alpha) || Dirichlet(pi) ) --------------------------
    # prior_const = sum(lgamma(beta)) - lgamma(sum(beta)) is precomputed.
    sum_a = jnp.sum(jnp.where(valid, alpha, 0.0), axis=-1, keepdims=True)

    lg_a, dg_a = _lgamma_digamma_pos(alpha)     # elementwise on the vreg
    lg_sa, dg_sa = _lgamma_digamma_pos(sum_a)   # (1, 1)

    t2 = -jnp.sum(jnp.where(valid, lg_a, 0.0), axis=-1, keepdims=True)
    t3 = jnp.sum(jnp.where(valid, (alpha - beta) * (dg_a - dg_sa), 0.0),
                 axis=-1, keepdims=True)
    kl = lg_sa + prior_ref[0, 0] + t2 + t3      # (1, 1)

    # ---- Pack both outputs into one lane-dense row ------------------------
    out_ref[...] = jnp.where(
        valid, alpha,
        jnp.where(lane == a_dim, jnp.broadcast_to(kl, alpha.shape), 0.0))


def init_params(key, a_dim, h_dim, n_layers):
    """Deterministic init mimicking nn.Linear (uniform +/- 1/sqrt(fan_in))."""
    dims = [a_dim] + [h_dim] * (n_layers - 1) + [a_dim]
    params = []
    for l in range(n_layers):
        fan_in, fan_out = dims[l], dims[l + 1]
        key, kw, kb = jax.random.split(key, 3)
        bound = 1.0 / float(fan_in) ** 0.5
        w = jax.random.uniform(kw, (fan_in, fan_out), jnp.float32, -bound, bound)
        b = jax.random.uniform(kb, (1, fan_out), jnp.float32, -bound, bound)
        params.append((w, b))
    return params


def ancestor_encoder_forward(noise, params, pi, sample_size, key):
    """Forward of AncestorIndDeepDirEncoder: returns (samples, a_kl)."""
    a_dim = noise.shape[-1]
    n_layers = len(params)

    # Pad the last layer to 128 output lanes (zero weights / zero bias; those
    # lanes are masked out inside the kernel and never read back).
    flat = []
    for l, (w, b) in enumerate(params):
        if l == n_layers - 1:
            w = jnp.pad(w, ((0, 0), (0, _LANES - w.shape[1])))
            b = jnp.pad(b, ((0, 0), (0, _LANES - b.shape[1])))
        flat.extend([w, b])
    pi_pad = jnp.pad(pi.reshape(1, a_dim), ((0, 0), (0, _LANES - a_dim)))

    # Prior-only lgamma terms hoisted out of the kernel (constant w.r.t. alpha).
    prior_const = (jnp.sum(_jsp_gammaln(pi))
                   - _jsp_gammaln(jnp.sum(pi))).reshape(1, 1).astype(jnp.float32)

    n_vec_in = 1 + 2 * n_layers
    in_specs = ([pl.BlockSpec(memory_space=pltpu.MemorySpace.VMEM)] * n_vec_in
                + [pl.BlockSpec(memory_space=pltpu.MemorySpace.SMEM),
                   pl.BlockSpec(memory_space=pltpu.MemorySpace.VMEM)])

    flops = int(sum(2 * w.size for w, _ in params) + 60 * _LANES)
    bytes_accessed = int(sum(x.size for x in flat) * 4
                         + (noise.size + 2 * _LANES + 2) * 4)
    kernel = functools.partial(_mlp_kl_kernel, n_layers, a_dim)

    packed = pl.pallas_call(
        kernel,
        out_shape=jax.ShapeDtypeStruct((1, _LANES), jnp.float32),
        in_specs=in_specs,
        out_specs=pl.BlockSpec(memory_space=pltpu.MemorySpace.VMEM),
        compiler_params=pltpu.CompilerParams(vmem_limit_bytes=4 << 20),
        cost_estimate=pl.CostEstimate(flops=flops, transcendentals=8 * _LANES,
                                      bytes_accessed=bytes_accessed),
    )(noise.reshape(1, a_dim), *flat, prior_const, pi_pad)

    alpha = packed[0, :a_dim]                   # already floored at 1e-6
    a_kl = packed[0, a_dim]

    # TODO(synk): gamma rejection sampling (the reparameterized Dirichlet
    # rsample) stays in XLA; an in-kernel Marsaglia-Tsang sampler via
    # pltpu.prng_random_bits would collapse this into the same pallas_call.
    g = jax.random.gamma(key, alpha, shape=(sample_size, a_dim)).astype(jnp.float32)
    s = jnp.sum(g, axis=-1, keepdims=True)
    samples = g / jnp.maximum(s, 1e-30)         # normalization fused into XLA
    return samples, a_kl


def _reference_kl(noise, params, pi):
    """Pure-JAX reference of MLP + KL for correctness checking."""
    x = noise
    for l, (w, b) in enumerate(params):
        x = x @ w + b[0]
        if l < len(params) - 1:
            x = jnp.maximum(x, 0.0)
        else:
            x = jnp.maximum(_softplus(x), _ALPHA_FLOOR)
    alpha = x
    sa = jnp.sum(alpha)
    sb = jnp.sum(pi)
    return (_jsp_gammaln(sa) - _jsp_gammaln(sb)
            - jnp.sum(_jsp_gammaln(alpha)) + jnp.sum(_jsp_gammaln(pi))
            + jnp.sum((alpha - pi) * (_jsp_digamma(alpha) - _jsp_digamma(sa))))


if __name__ == "__main__":
    a_dim, h_dim, n_layers, sample_size = 4, 32, 3, 8

    key = jax.random.PRNGKey(0)
    k_noise, k_params, k_sample = jax.random.split(key, 3)

    # self.noise = torch.zeros(a_dim).uniform_()
    noise = jax.random.uniform(k_noise, (a_dim,), jnp.float32)
    params = init_params(k_params, a_dim, h_dim, n_layers)
    # ancestor_prior_hp = torch.ones(4)
    pi = jnp.ones((a_dim,), jnp.float32)

    samples, a_kl = ancestor_encoder_forward(noise, params, pi, sample_size,
                                             k_sample)
    (samples, a_kl) = jax.block_until_ready((samples, a_kl))

    assert samples.shape == (sample_size, a_dim)
    assert a_kl.shape == ()
    assert bool(jnp.all(jnp.isfinite(samples)))
    assert bool(jnp.isfinite(a_kl))
    # Dirichlet samples lie on the simplex.
    assert bool(jnp.allclose(jnp.sum(samples, axis=-1), 1.0, atol=1e-5))
    # KL matches a pure-JAX reference (jax.scipy gammaln/digamma).
    kl_ref = _reference_kl(noise, params, pi)
    assert bool(jnp.allclose(a_kl, kl_ref, rtol=1e-3, atol=1e-3)), (a_kl, kl_ref)

    print("KERNEL_OK")
</pallas_src>

<mosaic_0001>
module attributes {stable_mosaic.version = 11 : i64} {
  func.func @_mlp_kl_kernel(%arg0: memref<1x4xf32, #tpu.memory_space<vmem>>, %arg1: memref<4x32xf32, #tpu.memory_space<vmem>>, %arg2: memref<1x32xf32, #tpu.memory_space<vmem>>, %arg3: memref<32x32xf32, #tpu.memory_space<vmem>>, %arg4: memref<1x32xf32, #tpu.memory_space<vmem>>, %arg5: memref<32x128xf32, #tpu.memory_space<vmem>>, %arg6: memref<1x128xf32, #tpu.memory_space<vmem>>, %arg7: memref<1x1xf32, #tpu.memory_space<smem>>, %arg8: memref<1x128xf32, #tpu.memory_space<vmem>>, %arg9: memref<1x128xf32, #tpu.memory_space<vmem>>) attributes {dimension_semantics = [], scalar_prefetch = 0 : i64, scratch_operands = 0 : i64, tpu.core_type = #tpu.core_type<tc>} {
    %c0 = arith.constant 0 : index
    %c0_0 = arith.constant 0 : index
    %0 = vector.load %arg0[%c0, %c0_0] : memref<1x4xf32, #tpu.memory_space<vmem>>, vector<1x4xf32>
    %c0_1 = arith.constant 0 : index
    %c0_2 = arith.constant 0 : index
    %1 = vector.load %arg1[%c0_1, %c0_2] : memref<4x32xf32, #tpu.memory_space<vmem>>, vector<4x32xf32>
    %c0_3 = arith.constant 0 : index
    %c0_4 = arith.constant 0 : index
    %2 = vector.load %arg2[%c0_3, %c0_4] : memref<1x32xf32, #tpu.memory_space<vmem>>, vector<1x32xf32>
    %cst = arith.constant dense<0.000000e+00> : vector<1x32xf32>
    %3 = tpu.matmul %0, %1, %cst {dimension_numbers = #tpu.dot_dimension_numbers<[1], [0], [0], [1], [0, 0, 1, 1], [], []>} : vector<1x4xf32>, vector<4x32xf32>, vector<1x32xf32> -> vector<1x32xf32>
    %4 = arith.addf %3, %2 : vector<1x32xf32>
    %cst_5 = arith.constant 0.000000e+00 : f32
    %5 = vector.broadcast %cst_5 : f32 to vector<1x32xf32>
    %6 = arith.maximumf %4, %5 : vector<1x32xf32>
    %c0_6 = arith.constant 0 : index
    %c0_7 = arith.constant 0 : index
    %7 = vector.load %arg3[%c0_6, %c0_7] : memref<32x32xf32, #tpu.memory_space<vmem>>, vector<32x32xf32>
    %c0_8 = arith.constant 0 : index
    %c0_9 = arith.constant 0 : index
    %8 = vector.load %arg4[%c0_8, %c0_9] : memref<1x32xf32, #tpu.memory_space<vmem>>, vector<1x32xf32>
    %cst_10 = arith.constant dense<0.000000e+00> : vector<1x32xf32>
    %9 = tpu.matmul %6, %7, %cst_10 {dimension_numbers = #tpu.dot_dimension_numbers<[1], [0], [0], [1], [0, 0, 1, 1], [], []>} : vector<1x32xf32>, vector<32x32xf32>, vector<1x32xf32> -> vector<1x32xf32>
    %10 = arith.addf %9, %8 : vector<1x32xf32>
    %cst_11 = arith.constant 0.000000e+00 : f32
    %11 = vector.broadcast %cst_11 : f32 to vector<1x32xf32>
    %12 = arith.maximumf %10, %11 : vector<1x32xf32>
    %c0_12 = arith.constant 0 : index
    %c0_13 = arith.constant 0 : index
    %13 = vector.load %arg5[%c0_12, %c0_13] : memref<32x128xf32, #tpu.memory_space<vmem>>, vector<32x128xf32>
    %c0_14 = arith.constant 0 : index
    %c0_15 = arith.constant 0 : index
    %14 = vector.load %arg6[%c0_14, %c0_15] : memref<1x128xf32, #tpu.memory_space<vmem>>, vector<1x128xf32>
    %cst_16 = arith.constant dense<0.000000e+00> : vector<1x128xf32>
    %15 = tpu.matmul %12, %13, %cst_16 {dimension_numbers = #tpu.dot_dimension_numbers<[1], [0], [0], [1], [0, 0, 1, 1], [], []>} : vector<1x32xf32>, vector<32x128xf32>, vector<1x128xf32> -> vector<1x128xf32>
    %16 = arith.addf %15, %14 : vector<1x128xf32>
    %cst_17 = arith.constant 0.000000e+00 : f32
    %17 = vector.broadcast %cst_17 : f32 to vector<1x128xf32>
    %18 = arith.maximumf %16, %17 : vector<1x128xf32>
    %19 = math.absf %16 : vector<1x128xf32>
    %cst_18 = arith.constant 0.000000e+00 : f32
    %20 = vector.broadcast %cst_18 : f32 to vector<1x128xf32>
    %21 = arith.subf %20, %19 : vector<1x128xf32>
    %22 = math.exp %21 : vector<1x128xf32>
    %23 = math.log1p %22 : vector<1x128xf32>
    %24 = arith.addf %18, %23 : vector<1x128xf32>
    %cst_19 = arith.constant 9.99999997E-7 : f32
    %25 = vector.broadcast %cst_19 : f32 to vector<1x128xf32>
    %26 = arith.maximumf %24, %25 : vector<1x128xf32>
    %c0_20 = arith.constant 0 : index
    %c0_21 = arith.constant 0 : index
    %27 = vector.load %arg8[%c0_20, %c0_21] : memref<1x128xf32, #tpu.memory_space<vmem>>, vector<1x128xf32>
    %28 = tpu.iota {dimensions = array<i32: 1>} : vector<1x128xi32>
    %c4_i32 = arith.constant 4 : i32
    %29 = vector.broadcast %c4_i32 : i32 to vector<1x128xi32>
    %30 = arith.cmpi slt, %28, %29 : vector<1x128xi32>
    %cst_22 = arith.constant 0.000000e+00 : f32
    %31 = vector.broadcast %cst_22 : f32 to vector<1x128xf32>
    %32 = arith.select %30, %26, %31 : vector<1x128xi1>, vector<1x128xf32>
    %cst_23 = arith.constant dense<0.000000e+00> : vector<1xf32>
    %33 = vector.multi_reduction <add>, %32, %cst_23 [1] : vector<1x128xf32> to vector<1xf32>
    %34 = vector.shape_cast %33 : vector<1xf32> to vector<1x1xf32>
    %cst_24 = arith.constant 1.000000e+00 : f32
    %35 = vector.broadcast %cst_24 : f32 to vector<1x128xf32>
    %36 = arith.divf %35, %26 : vector<1x128xf32>
    %cst_25 = arith.constant 1.000000e+00 : f32
    %37 = vector.broadcast %cst_25 : f32 to vector<1x128xf32>
    %38 = arith.addf %26, %37 : vector<1x128xf32>
    %39 = arith.mulf %26, %38 : vector<1x128xf32>
    %cst_26 = arith.constant 1.000000e+00 : f32
    %40 = vector.broadcast %cst_26 : f32 to vector<1x128xf32>
    %41 = arith.divf %40, %38 : vector<1x128xf32>
    %42 = arith.addf %36, %41 : vector<1x128xf32>
    %cst_27 = arith.constant 1.000000e+00 : f32
    %43 = vector.broadcast %cst_27 : f32 to vector<1x128xf32>
    %44 = arith.addf %38, %43 : vector<1x128xf32>
    %45 = arith.mulf %39, %44 : vector<1x128xf32>
    %cst_28 = arith.constant 1.000000e+00 : f32
    %46 = vector.broadcast %cst_28 : f32 to vector<1x128xf32>
    %47 = arith.divf %46, %44 : vector<1x128xf32>
    %48 = arith.addf %42, %47 : vector<1x128xf32>
    %cst_29 = arith.constant 1.000000e+00 : f32
    %49 = vector.broadcast %cst_29 : f32 to vector<1x128xf32>
    %50 = arith.addf %44, %49 : vector<1x128xf32>
    %51 = arith.mulf %45, %50 : vector<1x128xf32>
    %cst_30 = arith.constant 1.000000e+00 : f32
    %52 = vector.broadcast %cst_30 : f32 to vector<1x128xf32>
    %53 = arith.divf %52, %50 : vector<1x128xf32>
    %54 = arith.addf %48, %53 : vector<1x128xf32>
    %cst_31 = arith.constant 1.000000e+00 : f32
    %55 = vector.broadcast %cst_31 : f32 to vector<1x128xf32>
    %56 = arith.addf %50, %55 : vector<1x128xf32>
    %57 = arith.mulf %51, %56 : vector<1x128xf32>
    %cst_32 = arith.constant 1.000000e+00 : f32
    %58 = vector.broadcast %cst_32 : f32 to vector<1x128xf32>
    %59 = arith.divf %58, %56 : vector<1x128xf32>
    %60 = arith.addf %54, %59 : vector<1x128xf32>
    %cst_33 = arith.constant 1.000000e+00 : f32
    %61 = vector.broadcast %cst_33 : f32 to vector<1x128xf32>
    %62 = arith.addf %56, %61 : vector<1x128xf32>
    %63 = arith.mulf %57, %62 : vector<1x128xf32>
    %cst_34 = arith.constant 1.000000e+00 : f32
    %64 = vector.broadcast %cst_34 : f32 to vector<1x128xf32>
    %65 = arith.divf %64, %62 : vector<1x128xf32>
    %66 = arith.addf %60, %65 : vector<1x128xf32>
    %cst_35 = arith.constant 1.000000e+00 : f32
    %67 = vector.broadcast %cst_35 : f32 to vector<1x128xf32>
    %68 = arith.addf %62, %67 : vector<1x128xf32>
    %cst_36 = arith.constant 1.000000e+00 : f32
    %69 = vector.broadcast %cst_36 : f32 to vector<1x128xf32>
    %70 = arith.divf %69, %68 : vector<1x128xf32>
    %71 = arith.mulf %70, %70 : vector<1x128xf32>
    %72 = math.log %68 : vector<1x128xf32>
    %cst_37 = arith.constant 5.000000e-01 : f32
    %73 = vector.broadcast %cst_37 : f32 to vector<1x128xf32>
    %74 = arith.subf %68, %73 : vector<1x128xf32>
    %75 = arith.mulf %74, %72 : vector<1x128xf32>
    %76 = arith.subf %75, %68 : vector<1x128xf32>
    %cst_38 = arith.constant 0.918938517 : f32
    %77 = vector.broadcast %cst_38 : f32 to vector<1x128xf32>
    %78 = arith.addf %76, %77 : vector<1x128xf32>
    %cst_39 = arith.constant 5.95238118E-4 : f32
    %79 = vector.broadcast %cst_39 : f32 to vector<1x128xf32>
    %80 = arith.mulf %71, %79 : vector<1x128xf32>
    %cst_40 = arith.constant 7.93650805E-4 : f32
    %81 = vector.broadcast %cst_40 : f32 to vector<1x128xf32>
    %82 = arith.subf %81, %80 : vector<1x128xf32>
    %83 = arith.mulf %71, %82 : vector<1x128xf32>
    %cst_41 = arith.constant -0.00277777785 : f32
    %84 = vector.broadcast %cst_41 : f32 to vector<1x128xf32>
    %85 = arith.addf %84, %83 : vector<1x128xf32>
    %86 = arith.mulf %71, %85 : vector<1x128xf32>
    %cst_42 = arith.constant 0.0833333358 : f32
    %87 = vector.broadcast %cst_42 : f32 to vector<1x128xf32>
    %88 = arith.addf %87, %86 : vector<1x128xf32>
    %89 = arith.mulf %70, %88 : vector<1x128xf32>
    %90 = arith.addf %78, %89 : vector<1x128xf32>
    %91 = math.log %63 : vector<1x128xf32>
    %92 = arith.subf %90, %91 : vector<1x128xf32>
    %cst_43 = arith.constant 5.000000e-01 : f32
    %93 = vector.broadcast %cst_43 : f32 to vector<1x128xf32>
    %94 = arith.mulf %93, %70 : vector<1x128xf32>
    %95 = arith.subf %72, %94 : vector<1x128xf32>
    %cst_44 = arith.constant 0.0039682542 : f32
    %96 = vector.broadcast %cst_44 : f32 to vector<1x128xf32>
    %97 = arith.mulf %71, %96 : vector<1x128xf32>
    %cst_45 = arith.constant 0.00833333377 : f32
    %98 = vector.broadcast %cst_45 : f32 to vector<1x128xf32>
    %99 = arith.subf %98, %97 : vector<1x128xf32>
    %100 = arith.mulf %71, %99 : vector<1x128xf32>
    %cst_46 = arith.constant 0.0833333358 : f32
    %101 = vector.broadcast %cst_46 : f32 to vector<1x128xf32>
    %102 = arith.subf %101, %100 : vector<1x128xf32>
    %103 = arith.mulf %71, %102 : vector<1x128xf32>
    %104 = arith.subf %95, %103 : vector<1x128xf32>
    %105 = arith.subf %104, %66 : vector<1x128xf32>
    %cst_47 = arith.constant 1.000000e+00 : f32
    %106 = vector.broadcast %cst_47 : f32 to vector<1x1xf32>
    %107 = arith.divf %106, %34 : vector<1x1xf32>
    %cst_48 = arith.constant 1.000000e+00 : f32
    %108 = vector.broadcast %cst_48 : f32 to vector<1x1xf32>
    %109 = arith.addf %34, %108 : vector<1x1xf32>
    %110 = arith.mulf %34, %109 : vector<1x1xf32>
    %cst_49 = arith.constant 1.000000e+00 : f32
    %111 = vector.broadcast %cst_49 : f32 to vector<1x1xf32>
    %112 = arith.divf %111, %109 : vector<1x1xf32>
    %113 = arith.addf %107, %112 : vector<1x1xf32>
    %cst_50 = arith.constant 1.000000e+00 : f32
    %114 = vector.broadcast %cst_50 : f32 to vector<1x1xf32>
    %115 = arith.addf %109, %114 : vector<1x1xf32>
    %116 = arith.mulf %110, %115 : vector<1x1xf32>
    %cst_51 = arith.constant 1.000000e+00 : f32
    %117 = vector.broadcast %cst_51 : f32 to vector<1x1xf32>
    %118 = arith.divf %117, %115 : vector<1x1xf32>
    %119 = arith.addf %113, %118 : vector<1x1xf32>
    %cst_52 = arith.constant 1.000000e+00 : f32
    %120 = vector.broadcast %cst_52 : f32 to vector<1x1xf32>
    %121 = arith.addf %115, %120 : vector<1x1xf32>
    %122 = arith.mulf %116, %121 : vector<1x1xf32>
    %cst_53 = arith.constant 1.000000e+00 : f32
    %123 = vector.broadcast %cst_53 : f32 to vector<1x1xf32>
    %124 = arith.divf %123, %121 : vector<1x1xf32>
    %125 = arith.addf %119, %124 : vector<1x1xf32>
    %cst_54 = arith.constant 1.000000e+00 : f32
    %126 = vector.broadcast %cst_54 : f32 to vector<1x1xf32>
    %127 = arith.addf %121, %126 : vector<1x1xf32>
    %128 = arith.mulf %122, %127 : vector<1x1xf32>
    %cst_55 = arith.constant 1.000000e+00 : f32
    %129 = vector.broadcast %cst_55 : f32 to vector<1x1xf32>
    %130 = arith.divf %129, %127 : vector<1x1xf32>
    %131 = arith.addf %125, %130 : vector<1x1xf32>
    %cst_56 = arith.constant 1.000000e+00 : f32
    %132 = vector.broadcast %cst_56 : f32 to vector<1x1xf32>
    %133 = arith.addf %127, %132 : vector<1x1xf32>
    %134 = arith.mulf %128, %133 : vector<1x1xf32>
    %cst_57 = arith.constant 1.000000e+00 : f32
    %135 = vector.broadcast %cst_57 : f32 to vector<1x1xf32>
    %136 = arith.divf %135, %133 : vector<1x1xf32>
    %137 = arith.addf %131, %136 : vector<1x1xf32>
    %cst_58 = arith.constant 1.000000e+00 : f32
    %138 = vector.broadcast %cst_58 : f32 to vector<1x1xf32>
    %139 = arith.addf %133, %138 : vector<1x1xf32>
    %cst_59 = arith.constant 1.000000e+00 : f32
    %140 = vector.broadcast %cst_59 : f32 to vector<1x1xf32>
    %141 = arith.divf %140, %139 : vector<1x1xf32>
    %142 = arith.mulf %141, %141 : vector<1x1xf32>
    %143 = math.log %139 : vector<1x1xf32>
    %cst_60 = arith.constant 5.000000e-01 : f32
    %144 = vector.broadcast %cst_60 : f32 to vector<1x1xf32>
    %145 = arith.subf %139, %144 : vector<1x1xf32>
    %146 = arith.mulf %145, %143 : vector<1x1xf32>
    %147 = arith.subf %146, %139 : vector<1x1xf32>
    %cst_61 = arith.constant 0.918938517 : f32
    %148 = vector.broadcast %cst_61 : f32 to vector<1x1xf32>
    %149 = arith.addf %147, %148 : vector<1x1xf32>
    %cst_62 = arith.constant 5.95238118E-4 : f32
    %150 = vector.broadcast %cst_62 : f32 to vector<1x1xf32>
    %151 = arith.mulf %142, %150 : vector<1x1xf32>
    %cst_63 = arith.constant 7.93650805E-4 : f32
    %152 = vector.broadcast %cst_63 : f32 to vector<1x1xf32>
    %153 = arith.subf %152, %151 : vector<1x1xf32>
    %154 = arith.mulf %142, %153 : vector<1x1xf32>
    %cst_64 = arith.constant -0.00277777785 : f32
    %155 = vector.broadcast %cst_64 : f32 to vector<1x1xf32>
    %156 = arith.addf %155, %154 : vector<1x1xf32>
    %157 = arith.mulf %142, %156 : vector<1x1xf32>
    %cst_65 = arith.constant 0.0833333358 : f32
    %158 = vector.broadcast %cst_65 : f32 to vector<1x1xf32>
    %159 = arith.addf %158, %157 : vector<1x1xf32>
    %160 = arith.mulf %141, %159 : vector<1x1xf32>
    %161 = arith.addf %149, %160 : vector<1x1xf32>
    %162 = math.log %134 : vector<1x1xf32>
    %163 = arith.subf %161, %162 : vector<1x1xf32>
    %cst_66 = arith.constant 5.000000e-01 : f32
    %164 = vector.broadcast %cst_66 : f32 to vector<1x1xf32>
    %165 = arith.mulf %164, %141 : vector<1x1xf32>
    %166 = arith.subf %143, %165 : vector<1x1xf32>
    %cst_67 = arith.constant 0.0039682542 : f32
    %167 = vector.broadcast %cst_67 : f32 to vector<1x1xf32>
    %168 = arith.mulf %142, %167 : vector<1x1xf32>
    %cst_68 = arith.constant 0.00833333377 : f32
    %169 = vector.broadcast %cst_68 : f32 to vector<1x1xf32>
    %170 = arith.subf %169, %168 : vector<1x1xf32>
    %171 = arith.mulf %142, %170 : vector<1x1xf32>
    %cst_69 = arith.constant 0.0833333358 : f32
    %172 = vector.broadcast %cst_69 : f32 to vector<1x1xf32>
    %173 = arith.subf %172, %171 : vector<1x1xf32>
    %174 = arith.mulf %142, %173 : vector<1x1xf32>
    %175 = arith.subf %166, %174 : vector<1x1xf32>
    %176 = arith.subf %175, %137 : vector<1x1xf32>
    %cst_70 = arith.constant 0.000000e+00 : f32
    %177 = vector.broadcast %cst_70 : f32 to vector<1x128xf32>
    %178 = arith.select %30, %92, %177 : vector<1x128xi1>, vector<1x128xf32>
    %cst_71 = arith.constant dense<0.000000e+00> : vector<1xf32>
    %179 = vector.multi_reduction <add>, %178, %cst_71 [1] : vector<1x128xf32> to vector<1xf32>
    %180 = vector.shape_cast %179 : vector<1xf32> to vector<1x1xf32>
    %cst_72 = arith.constant 0.000000e+00 : f32
    %181 = vector.broadcast %cst_72 : f32 to vector<1x1xf32>
    %182 = arith.subf %181, %180 : vector<1x1xf32>
    %183 = arith.subf %26, %27 : vector<1x128xf32>
    %184 = vector.broadcast %176 : vector<1x1xf32> to vector<1x128xf32>
    %185 = arith.subf %105, %184 : vector<1x128xf32>
    %186 = arith.mulf %183, %185 : vector<1x128xf32>
    %cst_73 = arith.constant 0.000000e+00 : f32
    %187 = vector.broadcast %cst_73 : f32 to vector<1x128xf32>
    %188 = arith.select %30, %186, %187 : vector<1x128xi1>, vector<1x128xf32>
    %cst_74 = arith.constant dense<0.000000e+00> : vector<1xf32>
    %189 = vector.multi_reduction <add>, %188, %cst_74 [1] : vector<1x128xf32> to vector<1xf32>
    %190 = vector.shape_cast %189 : vector<1xf32> to vector<1x1xf32>
    %c0_75 = arith.constant 0 : index
    %c0_76 = arith.constant 0 : index
    %191 = memref.load %arg7[%c0_75, %c0_76] : memref<1x1xf32, #tpu.memory_space<smem>>
    %192 = vector.broadcast %191 : f32 to vector<1x1xf32>
    %193 = arith.addf %163, %192 : vector<1x1xf32>
    %194 = arith.addf %193, %182 : vector<1x1xf32>
    %195 = arith.addf %194, %190 : vector<1x1xf32>
    %c4_i32_77 = arith.constant 4 : i32
    %196 = vector.broadcast %c4_i32_77 : i32 to vector<1x128xi32>
    %197 = arith.cmpi eq, %28, %196 : vector<1x128xi32>
    %198 = vector.shape_cast %195 : vector<1x1xf32> to vector<1x1xf32>
    %199 = vector.broadcast %198 : vector<1x1xf32> to vector<1x128xf32>
    %cst_78 = arith.constant 0.000000e+00 : f32
    %200 = vector.broadcast %cst_78 : f32 to vector<1x128xf32>
    %201 = arith.select %197, %199, %200 : vector<1x128xi1>, vector<1x128xf32>
    %202 = arith.select %30, %26, %201 : vector<1x128xi1>, vector<1x128xf32>
    %c0_79 = arith.constant 0 : index
    %c0_80 = arith.constant 0 : index
    %203 = vector.load %arg9[%c0_79, %c0_80] : memref<1x128xf32, #tpu.memory_space<vmem>>, vector<1x128xf32>
    tpu.vector_store %arg9[%c0_79, %c0_80], %202 {strides = array<i32>} : memref<1x128xf32, #tpu.memory_space<vmem>>, vector<1x128xf32>,
    return
  }
}

</mosaic_0001>

<llo_original>
// kernel: tpu_custom_call.1
$region0: #{tpu_custom_call.1}
  #allocation0 [shape = 'u32[]', space=smem, size = 0x4, offset = 0x4, fixed_abs, tag = 'smem constant byte address 0x4 - core index']
  #allocation1 [shape = 'u32[144,128]{1,0:T(1,128)}', space=vmem, size = 0x12000, scoped, tag = 'internal scratch']
  #allocation2 [shape = 'f32[1,1]{1,0:T(1,128)S(6)}', space=smem, size = 0x200, scoped, tag = 'scoped memory for tpu_custom_call.1']
  %s0 = inlined_call_operand.vmem [shape: f32[1,4], index: 0, kind: input, shape index: {}]
  %s1 = inlined_call_operand.vmem [shape: f32[4,32], index: 1, kind: input, shape index: {}]
  %s2 = inlined_call_operand.vmem [shape: f32[1,32], index: 2, kind: input, shape index: {}]
  %s3 = inlined_call_operand.hbm [shape: f32[32,32], index: 3, kind: input, shape index: {}]
  %s4 = inlined_call_operand.vmem [shape: f32[1,32], index: 4, kind: input, shape index: {}]
  %s5 = inlined_call_operand.hbm [shape: f32[32,128], index: 5, kind: input, shape index: {}]
  %s6 = inlined_call_operand.vmem [shape: f32[1,128], index: 6, kind: input, shape index: {}]
  %s7 = inlined_call_operand.<no memory space> [shape: f32[1,1], index: 7, kind: input, shape index: {}]
  %s8 = inlined_call_operand.vmem [shape: f32[1,128], index: 8, kind: input, shape index: {}]
  %s9 = inlined_call_operand.hbm [shape: f32[1,128], index: 9, kind: output, shape index: {}]
  %s10 = sld [smem:[#allocation0]]
  $region54: #{tpu_custom_call.1} parent=0
    _
  %s12 = ssub.s32 1, %s10
  %s13 = scalar_select 0, %s12, %s10
  %14 = sst [smem:[#allocation2]] %s7
  $region1: #{tpu_custom_call.1} parent=0
    #allocation3 [shape = 'u8[16384]{0}', space=vmem, size = 0x4000, scoped, tag = 'input window, operand 3, single buffered']
    #allocation4 [shape = 's32[1]{0}', space=sflag, size = 0x4, scoped, tag = 'scoped memory for tpu_custom_call.1']
    #allocation5 [shape = 's32[1]{0}', space=sflag, size = 0x4, scoped, tag = 'scoped memory for tpu_custom_call.1']
    #allocation6 [shape = 'u8[16384]{0}', space=vmem, size = 0x4000, scoped, tag = 'input window, operand 5, single buffered']
    #allocation7 [shape = 's32[1]{0}', space=sflag, size = 0x4, scoped, tag = 'scoped memory for tpu_custom_call.1']
    #allocation8 [shape = 'u8[512]{0}', space=vmem, size = 0x400, scoped, tag = 'output window, operand 0, single buffered']
    %15 = vsyncpa [#allocation4], 0
    %16 = vsyncpa [#allocation7], 0
    %17 = vsyncpa [#allocation5], 0
    // Predicated region
    $region2: #{tpu_custom_call.1} parent=1 // pred_check
      _
    $region3: #{tpu_custom_call.1} parent=1 // pred_check_branch
      %19 = sbr.rel (0) target = $region5
    $region4: #{tpu_custom_call.1} parent=1 // pred_region
      _
    $region5: #{tpu_custom_call.1} parent=1 // pred_fallthru
      _
    // Predicated region
    $region6: #{tpu_custom_call.1} parent=1 // pred_check
      _
    $region7: #{tpu_custom_call.1} parent=1 // pred_check_branch
      %21 = sbr.rel (0) target = $region9
    $region8: #{tpu_custom_call.1} parent=1 // pred_region
      _
    $region9: #{tpu_custom_call.1} parent=1 // pred_fallthru
      _
    // Predicated region
    $region10: #{tpu_custom_call.1} parent=1 // pred_check
      _
    $region11: #{tpu_custom_call.1} parent=1 // pred_check_branch
      %23 = sbr.rel (0) target = $region13
    $region12: #{tpu_custom_call.1} parent=1 // pred_region
      _
    $region13: #{tpu_custom_call.1} parent=1 // pred_fallthru
      _
    // Predicated region
    $region14: #{tpu_custom_call.1} parent=1 // pred_check
      _
    $region15: #{tpu_custom_call.1} parent=1 // pred_check_branch
      %25 = sbr.rel (0) target = $region17
    $region16: #{tpu_custom_call.1} parent=1 // pred_region
      %s27 = ssub.s32 512, 512
      %28 = vsyncadd [#allocation4], %s27
      %s29 = sshll.u32 [#allocation3], 4
      %s30 = int_to_ptr.vmem [resolvable:$true] %s29
      %35 = dma.hbm_to_vmem [thread:$0]  %s3, 512, %s30, [#allocation4], 128, 128, 8
    $region17: #{tpu_custom_call.1} parent=1 // pred_fallthru
      _
    // Predicated region
    $region18: #{tpu_custom_call.1} parent=1 // pred_check
      _
    $region19: #{tpu_custom_call.1} parent=1 // pred_check_branch
      %37 = sbr.rel (0) target = $region21
    $region20: #{tpu_custom_call.1} parent=1 // pred_region
      _
    $region21: #{tpu_custom_call.1} parent=1 // pred_fallthru
      _
    // Predicated region
    $region22: #{tpu_custom_call.1} parent=1 // pred_check
      _
    $region23: #{tpu_custom_call.1} parent=1 // pred_check_branch
      %39 = sbr.rel (0) target = $region25
    $region24: #{tpu_custom_call.1} parent=1 // pred_region
      %s41 = ssub.s32 512, 512
      %42 = vsyncadd [#allocation7], %s41
      %s43 = sshll.u32 [#allocation6], 4
      %s44 = int_to_ptr.vmem [resolvable:$true] %s43
      %49 = dma.hbm_to_vmem [thread:$0]  %s5, 512, %s44, [#allocation7], 128, 128, 8
    $region25: #{tpu_custom_call.1} parent=1 // pred_fallthru
      _
    // Predicated region
    $region26: #{tpu_custom_call.1} parent=1 // pred_check
      _
    $region27: #{tpu_custom_call.1} parent=1 // pred_check_branch
      %51 = sbr.rel (0) target = $region29
    $region28: #{tpu_custom_call.1} parent=1 // pred_region
      _
    $region29: #{tpu_custom_call.1} parent=1 // pred_fallthru
      _
    // Predicated region
    $region30: #{tpu_custom_call.1} parent=1 // pred_check
      _
    $region31: #{tpu_custom_call.1} parent=1 // pred_check_branch
      %53 = sbr.rel (0) target = $region33
    $region32: #{tpu_custom_call.1} parent=1 // pred_region
      _
    $region33: #{tpu_custom_call.1} parent=1 // pred_fallthru
      _
    // Predicated region
    $region34: #{tpu_custom_call.1} parent=1 // pred_check
      _
    $region35: #{tpu_custom_call.1} parent=1 // pred_check_branch
      %55 = sbr.rel (0) target = $region37
    $region36: #{tpu_custom_call.1} parent=1 // pred_region
      _
    $region37: #{tpu_custom_call.1} parent=1 // pred_fallthru
      _
    // Predicated region
    $region38: #{tpu_custom_call.1} parent=1 // pred_check
      _
    $region39: #{tpu_custom_call.1} parent=1 // pred_check_branch
      %57 = sbr.rel (0) target = $region41
    $region40: #{tpu_custom_call.1} parent=1 // pred_region
      %58 = dma.done [#allocation4], 512
    $region41: #{tpu_custom_call.1} parent=1 // pred_fallthru
      _
    // Predicated region
    $region42: #{tpu_custom_call.1} parent=1 // pred_check
      _
    $region43: #{tpu_custom_call.1} parent=1 // pred_check_branch
      %60 = sbr.rel (0) target = $region45
    $region44: #{tpu_custom_call.1} parent=1 // pred_region
      %61 = dma.done [#allocation7], 512
    $region45: #{tpu_custom_call.1} parent=1 // pred_fallthru
      _
    %v62 = vld [vmem:[%s0] sm:$0x1]
    %v63 = vld [vmem:[%s1] sm:$0xf]
    %v64 = vld [vmem:[%s2] sm:$0x1]
    %vm65 = vcmask 31744
    %v67 = vsel %vm65, %v62, 0
    %vm69 = vcmask 1043456
    %v71 = vsel %vm69, %v63, 0
    %73 = vmatprep.subr.mxu0 0.0
    %74 = vmatpush1.msra.mxu0 %v71
    %75 = vmatprep.subr.mxu0 0.0
    %76 = vmatpush1.msra.mxu0 0.0
    %77 = vmatprep.subr.mxu0 0.0
    %78 = vmatpush1.msra.mxu0 0.0
    %79 = vmatprep.subr.mxu0 0.0
    %80 = vmatpush1.msra.mxu0 0.0
    %81 = vmatprep.subr.mxu0 0.0
    %82 = vmatpush1.msra.mxu0 0.0
    %83 = vmatprep.subr.mxu0 0.0
    %84 = vmatpush1.msra.mxu0 0.0
    %85 = vmatprep.subr.mxu0 0.0
    %86 = vmatpush1.msra.mxu0 0.0
    %87 = vmatprep.subr.mxu0 0.0
    %88 = vmatpush1.msra.mxu0 0.0
    %89 = vmatprep.subr.mxu0 0.0
    %90 = vmatpush1.msra.mxu0 0.0
    %91 = vmatprep.subr.mxu0 0.0
    %92 = vmatpush1.msra.mxu0 0.0
    %93 = vmatprep.subr.mxu0 0.0
    %94 = vmatpush1.msra.mxu0 0.0
    %95 = vmatprep.subr.mxu0 0.0
    %96 = vmatpush1.msra.mxu0 0.0
    %97 = vmatprep.subr.mxu0 0.0
    %98 = vmatpush1.msra.mxu0 0.0
    %99 = vmatprep.subr.mxu0 0.0
    %100 = vmatpush1.msra.mxu0 0.0
    %101 = vmatprep.subr.mxu0 0.0
    %102 = vmatpush1.msra.mxu0 0.0
    %103 = vmatprep.subr.mxu0 0.0
    %104 = vmatpush1.msra.mxu0 0.0
    %105 = vmatprep.subr.mxu0 0.0
    %106 = vmatpush1.msra.mxu0 0.0
    %107 = vmatprep.subr.mxu0 0.0
    %108 = vmatpush1.msra.mxu0 0.0
    %109 = vmatprep.subr.mxu0 0.0
    %110 = vmatpush1.msra.mxu0 0.0
    %111 = vmatprep.subr.mxu0 0.0
    %112 = vmatpush1.msra.mxu0 0.0
    %113 = vmatprep.subr.mxu0 0.0
    %114 = vmatpush1.msra.mxu0 0.0
    %115 = vmatprep.subr.mxu0 0.0
    %116 = vmatpush1.msra.mxu0 0.0
    %117 = vmatprep.subr.mxu0 0.0
    %118 = vmatpush1.msra.mxu0 0.0
    %119 = vmatprep.subr.mxu0 0.0
    %120 = vmatpush1.msra.mxu0 0.0
    %121 = vmatprep.subr.mxu0 0.0
    %122 = vmatpush1.msra.mxu0 0.0
    %123 = vmatprep.subr.mxu0 0.0
    %124 = vmatpush1.msra.mxu0 0.0
    %125 = vmatprep.subr.mxu0 0.0
    %126 = vmatpush1.msra.mxu0 0.0
    %127 = vmatprep.subr.mxu0 0.0
    %128 = vmatpush1.msra.mxu0 0.0
    %129 = vmatprep.subr.mxu0 0.0
    %130 = vmatpush1.msra.mxu0 0.0
    %131 = vmatprep.subr.mxu0 0.0
    %132 = vmatpush1.msra.mxu0 0.0
    %133 = vmatprep.subr.mxu0 0.0
    %134 = vmatpush1.msra.mxu0 0.0
    %135 = vmatprep.subr.mxu0 0.0
    %136 = vmatpush1.msra.mxu0 0.0
    %137 = vmatprep.mubr.f32.mxu0 0.0
    %138 = vmatmul.mubr.f32.gmra.mrb[0].mxu0 %v67
    %v139 = vpop.f32.mrb[0].mxu0
    %v140 = vadd.f32 %v64, %v139
    %v141 = vpop.f32.mrb[0].mxu0
    %142 = vdwg.mxu0
    %v143 = vmax.f32 %v140, 0.0
    %v144 = vld [vmem:[#allocation3] sm:$0xff]
    %v145 = vld [vmem:[#allocation3 + $0x8] sm:$0xff]
    %v146 = vld [vmem:[#allocation3 + $0x10] sm:$0xff]
    %v147 = vld [vmem:[#allocation3 + $0x18] sm:$0xff]
    %v148 = vld [vmem:[%s4] sm:$0x1]
    %vm149 = vcmask 261120
    %v151 = vsel %vm149, %v143, 0
    %153 = vmatprep.subr.mxu0 0.0
    %154 = vmatpush1.msra.mxu0 %v144
    %155 = vmatprep.subr.mxu0 0.0
    %156 = vmatpush1.msra.mxu0 %v145
    %157 = vmatprep.subr.mxu0 0.0
    %158 = vmatpush1.msra.mxu0 %v146
    %159 = vmatprep.subr.mxu0 0.0
    %160 = vmatpush1.msra.mxu0 %v147
    %161 = vmatprep.subr.mxu0 0.0
    %162 = vmatpush1.msra.mxu0 0.0
    %163 = vmatprep.subr.mxu0 0.0
    %164 = vmatpush1.msra.mxu0 0.0
    %165 = vmatprep.subr.mxu0 0.0
    %166 = vmatpush1.msra.mxu0 0.0
    %167 = vmatprep.subr.mxu0 0.0
    %168 = vmatpush1.msra.mxu0 0.0
    %169 = vmatprep.subr.mxu0 0.0
    %170 = vmatpush1.msra.mxu0 0.0
    %171 = vmatprep.subr.mxu0 0.0
    %172 = vmatpush1.msra.mxu0 0.0
    %173 = vmatprep.subr.mxu0 0.0
    %174 = vmatpush1.msra.mxu0 0.0
    %175 = vmatprep.subr.mxu0 0.0
    %176 = vmatpush1.msra.mxu0 0.0
    %177 = vmatprep.subr.mxu0 0.0
    %178 = vmatpush1.msra.mxu0 0.0
    %179 = vmatprep.subr.mxu0 0.0
    %180 = vmatpush1.msra.mxu0 0.0
    %181 = vmatprep.subr.mxu0 0.0
    %182 = vmatpush1.msra.mxu0 0.0
    %183 = vmatprep.subr.mxu0 0.0
    %184 = vmatpush1.msra.mxu0 0.0
    %185 = vmatprep.subr.mxu0 0.0
    %186 = vmatpush1.msra.mxu0 0.0
    %187 = vmatprep.subr.mxu0 0.0
    %188 = vmatpush1.msra.mxu0 0.0
    %189 = vmatprep.subr.mxu0 0.0
    %190 = vmatpush1.msra.mxu0 0.0
    %191 = vmatprep.subr.mxu0 0.0
    %192 = vmatpush1.msra.mxu0 0.0
    %193 = vmatprep.subr.mxu0 0.0
    %194 = vmatpush1.msra.mxu0 0.0
    %195 = vmatprep.subr.mxu0 0.0
    %196 = vmatpush1.msra.mxu0 0.0
    %197 = vmatprep.subr.mxu0 0.0
    %198 = vmatpush1.msra.mxu0 0.0
    %199 = vmatprep.subr.mxu0 0.0
    %200 = vmatpush1.msra.mxu0 0.0
    %201 = vmatprep.subr.mxu0 0.0
    %202 = vmatpush1.msra.mxu0 0.0
    %203 = vmatprep.subr.mxu0 0.0
    %204 = vmatpush1.msra.mxu0 0.0
    %205 = vmatprep.subr.mxu0 0.0
    %206 = vmatpush1.msra.mxu0 0.0
    %207 = vmatprep.subr.mxu0 0.0
    %208 = vmatpush1.msra.mxu0 0.0
    %209 = vmatprep.subr.mxu0 0.0
    %210 = vmatpush1.msra.mxu0 0.0
    %211 = vmatprep.subr.mxu0 0.0
    %212 = vmatpush1.msra.mxu0 0.0
    %213 = vmatprep.subr.mxu0 0.0
    %214 = vmatpush1.msra.mxu0 0.0
    %215 = vmatprep.subr.mxu0 0.0
    %216 = vmatpush1.msra.mxu0 0.0
    %217 = vmatprep.mubr.f32.mxu0 0.0
    %218 = vmatmul.mubr.f32.gmra.mrb[0].mxu0 %v151
    %v219 = vpop.f32.mrb[0].mxu0
    %v220 = vadd.f32 %v148, %v219
    %v221 = vpop.f32.mrb[0].mxu0
    %222 = vdwg.mxu0
    %v223 = vmax.f32 %v220, 0.0
    %v224 = vld [vmem:[#allocation6] sm:$0xff]
    %v225 = vld [vmem:[#allocation6 + $0x8] sm:$0xff]
    %v226 = vld [vmem:[#allocation6 + $0x10] sm:$0xff]
    %v227 = vld [vmem:[#allocation6 + $0x18] sm:$0xff]
    %v228 = vld [vmem:[%s6] sm:$0x1]
    %v230 = vsel %vm149, %v223, 0
    %232 = vmatprep.subr.mxu0 0.0
    %233 = vmatpush1.msra.mxu0 %v224
    %234 = vmatprep.subr.mxu0 0.0
    %235 = vmatpush1.msra.mxu0 %v225
    %236 = vmatprep.subr.mxu0 0.0
    %237 = vmatpush1.msra.mxu0 %v226
    %238 = vmatprep.subr.mxu0 0.0
    %239 = vmatpush1.msra.mxu0 %v227
    %240 = vmatprep.subr.mxu0 0.0
    %241 = vmatpush1.msra.mxu0 0.0
    %242 = vmatprep.subr.mxu0 0.0
    %243 = vmatpush1.msra.mxu0 0.0
    %244 = vmatprep.subr.mxu0 0.0
    %245 = vmatpush1.msra.mxu0 0.0
    %246 = vmatprep.subr.mxu0 0.0
    %247 = vmatpush1.msra.mxu0 0.0
    %248 = vmatprep.subr.mxu0 0.0
    %249 = vmatpush1.msra.mxu0 0.0
    %250 = vmatprep.subr.mxu0 0.0
    %251 = vmatpush1.msra.mxu0 0.0
    %252 = vmatprep.subr.mxu0 0.0
    %253 = vmatpush1.msra.mxu0 0.0
    %254 = vmatprep.subr.mxu0 0.0
    %255 = vmatpush1.msra.mxu0 0.0
    %256 = vmatprep.subr.mxu0 0.0
    %257 = vmatpush1.msra.mxu0 0.0
    %258 = vmatprep.subr.mxu0 0.0
    %259 = vmatpush1.msra.mxu0 0.0
    %260 = vmatprep.subr.mxu0 0.0
    %261 = vmatpush1.msra.mxu0 0.0
    %262 = vmatprep.subr.mxu0 0.0
    %263 = vmatpush1.msra.mxu0 0.0
    %264 = vmatprep.subr.mxu0 0.0
    %265 = vmatpush1.msra.mxu0 0.0
    %266 = vmatprep.subr.mxu0 0.0
    %267 = vmatpush1.msra.mxu0 0.0
    %268 = vmatprep.subr.mxu0 0.0
    %269 = vmatpush1.msra.mxu0 0.0
    %270 = vmatprep.subr.mxu0 0.0
    %271 = vmatpush1.msra.mxu0 0.0
    %272 = vmatprep.subr.mxu0 0.0
    %273 = vmatpush1.msra.mxu0 0.0
    %274 = vmatprep.subr.mxu0 0.0
    %275 = vmatpush1.msra.mxu0 0.0
    %276 = vmatprep.subr.mxu0 0.0
    %277 = vmatpush1.msra.mxu0 0.0
    %278 = vmatprep.subr.mxu0 0.0
    %279 = vmatpush1.msra.mxu0 0.0
    %280 = vmatprep.subr.mxu0 0.0
    %281 = vmatpush1.msra.mxu0 0.0
    %282 = vmatprep.subr.mxu0 0.0
    %283 = vmatpush1.msra.mxu0 0.0
    %284 = vmatprep.subr.mxu0 0.0
    %285 = vmatpush1.msra.mxu0 0.0
    %286 = vmatprep.subr.mxu0 0.0
    %287 = vmatpush1.msra.mxu0 0.0
    %288 = vmatprep.subr.mxu0 0.0
    %289 = vmatpush1.msra.mxu0 0.0
    %290 = vmatprep.subr.mxu0 0.0
    %291 = vmatpush1.msra.mxu0 0.0
    %292 = vmatprep.subr.mxu0 0.0
    %293 = vmatpush1.msra.mxu0 0.0
    %294 = vmatprep.subr.mxu0 0.0
    %295 = vmatpush1.msra.mxu0 0.0
    %296 = vmatprep.mubr.f32.mxu0 0.0
    %297 = vmatmul.mubr.f32.gmra.mrb[0].mxu0 %v230
    %v298 = vpop.f32.mrb[0].mxu0
    %v299 = vadd.f32 %v228, %v298
    %v300 = vpop.f32.mrb[0].mxu0
    %301 = vdwg.mxu0
    %v302 = vmax.f32 %v299, 0.0
    %v303 = vand.u32 2147483647, %v299
    %v304 = vsub.f32 0.0, %v303
    %v305 = vmul.f32 %v304, 1.442695
    %v306 = vpow.pop %v305
    %v307 = vadd.f32 %v306, 1.0
    %v308 = vlog2.pop %v307
    %v309 = vmul.f32 %v308, 0.6931472
    %v310 = vmul.f32 -0.5, %v306
    %v311 = vadd.f32 %v310, 1.0
    %v312 = vmul.f32 %v311, %v306
    %v313 = vand.u32 2147483647, %v306
    %vm314 = vcmp.lt.f32.partialorder %v313, 0.0004427343
    %v315 = vsel %vm314, %v312, %v309
    %v316 = vadd.f32 %v302, %v315
    %v317 = vmax.f32 %v316, 1e-06
    %v318 = vld [vmem:[%s8] sm:$0x1]
    %v319 = vlaneseq
    %v320 = vand.u32 %v319, 127
    %vm321 = vcmp.lt.s32.totalorder %v320, 4
    %v322 = vsel %vm321, %v317, 0.0
    %vm323 = vcmask 1040384
    %v324 = vsel %vm323, %v322, 0.0
    %325 = vadd.xlane.f32.xlu0 %v324
    %v326 = vpop.xlane.xlu0 %325
    %v327 = vrcp.pop %v317
    %v328 = vmul.f32 1.0, %v327
    %v329 = vadd.f32 %v317, 1.0
    %v330 = vmul.f32 %v317, %v329
    %v331 = vrcp.pop %v329
    %v332 = vmul.f32 1.0, %v331
    %v333 = vadd.f32 %v328, %v332
    %v334 = vadd.f32 %v329, 1.0
    %v335 = vmul.f32 %v330, %v334
    %v336 = vrcp.pop %v334
    %v337 = vmul.f32 1.0, %v336
    %v338 = vadd.f32 %v333, %v337
    %v339 = vadd.f32 %v334, 1.0
    %v340 = vmul.f32 %v335, %v339
    %v341 = vrcp.pop %v339
    %v342 = vmul.f32 1.0, %v341
    %v343 = vadd.f32 %v338, %v342
    %v344 = vadd.f32 %v339, 1.0
    %v345 = vmul.f32 %v340, %v344
    %v346 = vrcp.pop %v344
    %v347 = vmul.f32 1.0, %v346
    %v348 = vadd.f32 %v343, %v347
    %v349 = vadd.f32 %v344, 1.0
    %v350 = vmul.f32 %v345, %v349
    %v351 = vrcp.pop %v349
    %v352 = vmul.f32 1.0, %v351
    %v353 = vadd.f32 %v348, %v352
    %v354 = vadd.f32 %v349, 1.0
    %v355 = vrcp.pop %v354
    %v356 = vmul.f32 1.0, %v355
    %v357 = vmul.f32 %v356, %v356
    %v358 = vlog2.pop %v354
    %v359 = vmul.f32 %v358, 0.6931472
    %v360 = vsub.f32 %v354, 0.5
    %v361 = vmul.f32 %v360, %v359
    %v362 = vsub.f32 %v361, %v354
    %v363 = vadd.f32 %v362, 0.9189385
    %v364 = vmul.f32 %v357, 0.0005952381
    %v365 = vsub.f32 0.0007936508, %v364
    %v366 = vmul.f32 %v357, %v365
    %v367 = vadd.f32 %v366, -0.0027777778
    %v368 = vmul.f32 %v357, %v367
    %v369 = vadd.f32 %v368, 0.083333336
    %v370 = vmul.f32 %v356, %v369
    %v371 = vadd.f32 %v363, %v370
    %v372 = vlog2.pop %v350
    %v373 = vmul.f32 %v372, 0.6931472
    %v374 = vsub.f32 %v371, %v373
    %v375 = vmul.f32 %v356, 0.5
    %v376 = vsub.f32 %v359, %v375
    %v377 = vmul.f32 %v357, 0.003968254
    %v378 = vsub.f32 0.008333334, %v377
    %v379 = vmul.f32 %v357, %v378
    %v380 = vsub.f32 0.083333336, %v379
    %v381 = vmul.f32 %v357, %v380
    %v382 = vsub.f32 %v376, %v381
    %v383 = vsub.f32 %v382, %v353
    %v384 = vrcp.pop %v326
    %v385 = vmul.f32 1.0, %v384
    %v386 = vadd.f32 %v326, 1.0
    %v387 = vmul.f32 %v326, %v386
    %v388 = vrcp.pop %v386
    %v389 = vmul.f32 1.0, %v388
    %v390 = vadd.f32 %v385, %v389
    %v391 = vadd.f32 %v386, 1.0
    %v392 = vmul.f32 %v387, %v391
    %v393 = vrcp.pop %v391
    %v394 = vmul.f32 1.0, %v393
    %v395 = vadd.f32 %v390, %v394
    %v396 = vadd.f32 %v391, 1.0
    %v397 = vmul.f32 %v392, %v396
    %v398 = vrcp.pop %v396
    %v399 = vmul.f32 1.0, %v398
    %v400 = vadd.f32 %v395, %v399
    %v401 = vadd.f32 %v396, 1.0
    %v402 = vmul.f32 %v397, %v401
    %v403 = vrcp.pop %v401
    %v404 = vmul.f32 1.0, %v403
    %v405 = vadd.f32 %v400, %v404
    %v406 = vadd.f32 %v401, 1.0
    %v407 = vmul.f32 %v402, %v406
    %v408 = vrcp.pop %v406
    %v409 = vmul.f32 1.0, %v408
    %v410 = vadd.f32 %v405, %v409
    %v411 = vadd.f32 %v406, 1.0
    %v412 = vrcp.pop %v411
    %v413 = vmul.f32 1.0, %v412
    %v414 = vmul.f32 %v413, %v413
    %v415 = vlog2.pop %v411
    %v416 = vmul.f32 %v415, 0.6931472
    %v417 = vsub.f32 %v411, 0.5
    %v418 = vmul.f32 %v417, %v416
    %v419 = vsub.f32 %v418, %v411
    %v420 = vadd.f32 %v419, 0.9189385
    %v421 = vmul.f32 %v414, 0.0005952381
    %v422 = vsub.f32 0.0007936508, %v421
    %v423 = vmul.f32 %v414, %v422
    %v424 = vadd.f32 %v423, -0.0027777778
    %v425 = vmul.f32 %v414, %v424
    %v426 = vadd.f32 %v425, 0.083333336
    %v427 = vmul.f32 %v413, %v426
    %v428 = vadd.f32 %v420, %v427
    %v429 = vlog2.pop %v407
    %v430 = vmul.f32 %v429, 0.6931472
    %v431 = vsub.f32 %v428, %v430
    %v432 = vmul.f32 %v413, 0.5
    %v433 = vsub.f32 %v416, %v432
    %v434 = vmul.f32 %v414, 0.003968254
    %v435 = vsub.f32 0.008333334, %v434
    %v436 = vmul.f32 %v414, %v435
    %v437 = vsub.f32 0.083333336, %v436
    %v438 = vmul.f32 %v414, %v437
    %v439 = vsub.f32 %v433, %v438
    %v440 = vsub.f32 %v439, %v410
    %v441 = vsel %vm321, %v374, 0.0
    %v442 = vsel %vm323, %v441, 0.0
    %443 = vadd.xlane.f32.xlu0 %v442
    %v444 = vpop.xlane.xlu0 %443
    %v445 = vsub.f32 0.0, %v444
    %v446 = vsub.f32 %v317, %v318
    %v447 = vsub.f32 %v383, %v440
    %v448 = vmul.f32 %v446, %v447
    %v449 = vsel %vm321, %v448, 0.0
    %v450 = vsel %vm323, %v449, 0.0
    %451 = vadd.xlane.f32.xlu0 %v450
    %v452 = vpop.xlane.xlu0 %451
    %s453 = sld [smem:[#allocation2]]
    %v454 = vstv %s453
    %v455 = vadd.f32 %v431, %v454
    %v456 = vadd.f32 %v455, %v445
    %v457 = vadd.f32 %v456, %v452
    %vm458 = vcmp.eq.s32.totalorder %v320, 4
    %v459 = vsel %vm458, %v457, 0.0
    %v460 = vsel %vm321, %v317, %v459
    %461 = vst [vmem:[#allocation8] sm:$0x1] %v460
    // Predicated region
    $region46: #{tpu_custom_call.1} parent=1 // pred_check
      _
    $region47: #{tpu_custom_call.1} parent=1 // pred_check_branch
      %463 = sbr.rel (0) target = $region49
    $region48: #{tpu_custom_call.1} parent=1 // pred_region
      %s465 = ssub.s32 16, 16
      %466 = vsyncadd [#allocation5], %s465
      %s468 = sshll.u32 [#allocation8], 4
      %s469 = int_to_ptr.vmem [resolvable:$true] %s468
      %471 = dma.vmem_to_hbm [thread:$0]  %s469, 16, %s9, [#allocation5]
    $region49: #{tpu_custom_call.1} parent=1 // pred_fallthru
      _
    // Predicated region
    $region50: #{tpu_custom_call.1} parent=1 // pred_check
      _
    $region51: #{tpu_custom_call.1} parent=1 // pred_check_branch
      %473 = sbr.rel (0) target = $region53
    $region52: #{tpu_custom_call.1} parent=1 // pred_region
      %474 = dma.done [#allocation5], 16
    $region53: #{tpu_custom_call.1} parent=1 // pred_fallthru
      _
    %475 = vsyncpa [#allocation4], 1
    %476 = vsyncpa [#allocation7], 1
    %477 = vsyncpa [#allocation5], 1

</llo_original>
